<compile_context>
chip_gen: v6e
topology: v6e:2x2x1
jax: 0.10.0
libtpu: 0.0.40
codegen_flags: <defaults>
</compile_context>

<pallas_src>
import jax
import jax.numpy as jnp
from jax import lax
from jax.experimental import pallas as pl
from jax.experimental.pallas import tpu as pltpu


def _round_up(x: int, m: int) -> int:
    return ((x + m - 1) // m) * m


def _wn_matmul_kernel_acc(scale_ref, x_ref, w_ref, o_ref, acc_ref):
    # scale_ref: (1, 1) f32 in SMEM  -- g / ||v||_F
    # x_ref:     (tm, tk) input tile
    # w_ref:     (tn, tk) weight tile in native (out, in) layout
    # o_ref:     (tm, tn) output tile
    # acc_ref:   (tm, tn) f32 accumulator (resident across the K grid axis)
    @pl.when(pl.program_id(2) == 0)
    def _():
        acc_ref[...] = jnp.zeros_like(acc_ref)

    acc_ref[...] += lax.dot_general(
        x_ref[...], w_ref[...],
        dimension_numbers=(((1,), (1,)), ((), ())),   # contract K with K
        preferred_element_type=jnp.float32,
    )

    @pl.when(pl.program_id(2) == pl.num_programs(2) - 1)
    def _():
        o_ref[...] = (acc_ref[...] * scale_ref[0, 0]).astype(o_ref.dtype)


def _wn_matmul_kernel_single(scale_ref, x_ref, w_ref, o_ref):
    # Single K step: no accumulator scratch, direct store.
    acc = lax.dot_general(
        x_ref[...], w_ref[...],
        dimension_numbers=(((1,), (1,)), ((), ())),
        preferred_element_type=jnp.float32,
    )
    o_ref[...] = (acc * scale_ref[0, 0]).astype(o_ref.dtype)


def linear_transform(x, v, g, *,
                     tm_target=512, tk_target=512, tn_target=512,
                     compute_dtype=None):
    """y = x @ (g * v / ||v||_F).T  with x of shape (..., in_dim), v (out, in)."""
    out_dim, in_dim = v.shape
    orig_leading = x.shape[:-1]
    out_dtype = jnp.promote_types(x.dtype, v.dtype)

    x2 = x.reshape(-1, in_dim)
    M, K = x2.shape
    N = out_dim

    # weight_norm(dim=None): one scalar scale over the whole weight matrix,
    # computed in f32 on the unpadded weight.
    scale = jnp.asarray(g, jnp.float32) / jnp.sqrt(
        jnp.sum(jnp.asarray(v, jnp.float32) ** 2))
    scale2d = jnp.reshape(scale, (1, 1))

    # Optional reduced-precision MXU operands (accumulation stays f32).
    if compute_dtype is not None:
        x2 = x2.astype(compute_dtype)
        v_in = v.astype(compute_dtype)
    else:
        v_in = v

    # ---- tile selection -----------------------------------------------------
    # Dims that fit in one tile use full-extent blocks (no padding needed);
    # larger dims use MXU-friendly 512-wide tiles (multiples of 8 / 128 / 256).
    tm = M if M <= tm_target else tm_target
    tk = K if K <= tk_target else tk_target
    tn = N if N <= tn_target else tn_target

    Mp, Kp, Np = _round_up(M, tm), _round_up(K, tk), _round_up(N, tn)
    grid_m, grid_n, grid_k = Mp // tm, Np // tn, Kp // tk

    # v7x megacore: make sure the parallel axes yield >= 2 blocks when it can
    # be done without introducing padding (both TCs get work).
    if grid_m * grid_n == 1:
        if M >= 16 and M % 16 == 0:
            tm = M // 2
            grid_m = 2
        elif N >= 256 and N % 256 == 0:
            tn = N // 2
            grid_n = 2

    # Pad only when genuinely required (ragged large dims).
    if (Mp, Kp) != (M, K):
        x2 = jnp.pad(x2, ((0, Mp - M), (0, Kp - K)))
    if (Np, Kp) != (N, K):
        v_in = jnp.pad(v_in, ((0, Np - N), (0, Kp - K)))

    # ---- VMEM budget: actual double-buffered footprint + margin, cap 48 MiB.
    xb = jnp.dtype(x2.dtype).itemsize
    wb = jnp.dtype(v_in.dtype).itemsize
    ob = jnp.dtype(out_dtype).itemsize
    footprint = 2 * (tm * tk * xb + tn * tk * wb + tm * tn * ob)
    if grid_k > 1:
        footprint += tm * tn * 4  # f32 accumulator scratch
    vmem_limit = int(min(48 * 1024 * 1024, footprint + 16 * 1024 * 1024))

    smem_spec = pl.BlockSpec(memory_space=pltpu.MemorySpace.SMEM)

    if grid_k == 1:
        # Whole K in one tile: no reduction axis, no accumulator scratch.
        grid = (grid_m, grid_n)
        kernel = _wn_matmul_kernel_single
        in_specs = [
            smem_spec,
            pl.BlockSpec((tm, tk), lambda i, j: (i, 0)),   # x tile
            pl.BlockSpec((tn, tk), lambda i, j: (j, 0)),   # v tile (native N,K)
        ]
        out_specs = pl.BlockSpec((tm, tn), lambda i, j: (i, j))
        scratch_shapes = []
        dim_sem = ("parallel", "parallel")
    else:
        grid = (grid_m, grid_n, grid_k)
        kernel = _wn_matmul_kernel_acc
        in_specs = [
            smem_spec,
            pl.BlockSpec((tm, tk), lambda i, j, k: (i, k)),  # x tile
            pl.BlockSpec((tn, tk), lambda i, j, k: (j, k)),  # v tile (native N,K)
        ]
        out_specs = pl.BlockSpec((tm, tn), lambda i, j, k: (i, j))
        scratch_shapes = [pltpu.VMEM((tm, tn), jnp.float32)]
        dim_sem = ("parallel", "parallel", "arbitrary")

    out = pl.pallas_call(
        kernel,
        out_shape=jax.ShapeDtypeStruct((Mp, Np), out_dtype),
        grid_spec=pltpu.PrefetchScalarGridSpec(
            num_scalar_prefetch=0,
            grid=grid,
            in_specs=in_specs,
            out_specs=out_specs,
            scratch_shapes=scratch_shapes,
        ),
        compiler_params=pltpu.CompilerParams(
            dimension_semantics=dim_sem,
            vmem_limit_bytes=vmem_limit,
        ),
    )(scale2d, x2, v_in)

    if (Mp, Np) != (M, N):
        out = out[:M, :N]
    return out.reshape(*orig_leading, out_dim)


def reference(x, v, g):
    """Pure-JAX weight_norm(Linear(bias=False), dim=None) forward."""
    w_eff = v * (g / jnp.sqrt(jnp.sum(v ** 2)))
    return jnp.einsum("...k,nk->...n", x, w_eff)


if __name__ == "__main__":
    B, S, IN_DIM, OUT_DIM = 2, 8, 32, 16

    key = jax.random.PRNGKey(0)
    k_x, k_v = jax.random.split(key, 2)

    x = jax.random.normal(k_x, (B, S, IN_DIM), jnp.float32)
    bound = 1.0 / (IN_DIM ** 0.5)
    v = jax.random.uniform(k_v, (OUT_DIM, IN_DIM), jnp.float32, -bound, bound)
    # weight_norm init sets g = ||v||_F; perturb it so the scale path is exercised.
    g = jnp.sqrt(jnp.sum(v ** 2)) * jnp.float32(1.25)

    out = linear_transform(x, v, g)
    out = jax.block_until_ready(out)

    ref = reference(x, v, g)
    assert out.shape == (B, S, OUT_DIM), out.shape
    assert bool(jnp.all(jnp.isfinite(out)))
    assert bool(jnp.allclose(out, ref, atol=1e-5, rtol=1e-5)), (out, ref)

    print("KERNEL_OK")
</pallas_src>

<mosaic_0001>
module attributes {stable_mosaic.version = 11 : i64} {
  func.func @_wn_matmul_kernel_single(%arg0: i32, %arg1: i32, %arg2: memref<1x1xf32, #tpu.memory_space<smem>>, %arg3: memref<8x32xf32, #tpu.memory_space<vmem>>, %arg4: memref<16x32xf32, #tpu.memory_space<vmem>>, %arg5: memref<8x16xf32, #tpu.memory_space<vmem>>) attributes {dimension_semantics = [#tpu.dimension_semantics<parallel>, #tpu.dimension_semantics<parallel>], iteration_bounds = array<i64: 2, 1>, scalar_prefetch = 0 : i64, scratch_operands = 0 : i64, tpu.core_type = #tpu.core_type<tc>, window_params = [{transform_indices = @transform_0, window_bounds = array<i64: 1, 1>}, {transform_indices = @transform_1, window_bounds = array<i64: 8, 32>}, {transform_indices = @transform_2, window_bounds = array<i64: 16, 32>}, {transform_indices = @transform_3, window_bounds = array<i64: 8, 16>}]} {
    %c0 = arith.constant 0 : index
    %c0_0 = arith.constant 0 : index
    %0 = vector.load %arg3[%c0, %c0_0] : memref<8x32xf32, #tpu.memory_space<vmem>>, vector<8x32xf32>
    %c0_1 = arith.constant 0 : index
    %c0_2 = arith.constant 0 : index
    %1 = vector.load %arg4[%c0_1, %c0_2] : memref<16x32xf32, #tpu.memory_space<vmem>>, vector<16x32xf32>
    %cst = arith.constant dense<0.000000e+00> : vector<8x16xf32>
    %2 = tpu.matmul %0, %1, %cst {dimension_numbers = #tpu.dot_dimension_numbers<[1], [1], [0], [0], [0, 0, 1, 0], [], []>} : vector<8x32xf32>, vector<16x32xf32>, vector<8x16xf32> -> vector<8x16xf32>
    %c0_3 = arith.constant 0 : index
    %c0_4 = arith.constant 0 : index
    %3 = memref.load %arg2[%c0_3, %c0_4] : memref<1x1xf32, #tpu.memory_space<smem>>
    %4 = vector.broadcast %3 : f32 to vector<8x16xf32>
    %5 = arith.mulf %2, %4 : vector<8x16xf32>
    %c0_5 = arith.constant 0 : index
    %c0_6 = arith.constant 0 : index
    %6 = vector.load %arg5[%c0_5, %c0_6] : memref<8x16xf32, #tpu.memory_space<vmem>>, vector<8x16xf32>
    tpu.vector_store %arg5[%c0_5, %c0_6], %5 {strides = array<i32>} : memref<8x16xf32, #tpu.memory_space<vmem>>, vector<8x16xf32>,
    return
  }
  func.func @transform_0(%arg0: i32, %arg1: i32) -> (i32, i32) {
    %c0_i32 = arith.constant 0 : i32
    %c0_i32_0 = arith.constant 0 : i32
    %c0_i32_1 = arith.constant 0 : i32
    return %c0_i32, %c0_i32_0 : i32, i32
  }
  func.func @transform_1(%arg0: i32, %arg1: i32) -> (i32, i32) {
    %c0_i32 = arith.constant 0 : i32
    %c0_i32_0 = arith.constant 0 : i32
    return %arg0, %c0_i32 : i32, i32
  }
  func.func @transform_2(%arg0: i32, %arg1: i32) -> (i32, i32) {
    %c0_i32 = arith.constant 0 : i32
    %c0_i32_0 = arith.constant 0 : i32
    return %arg1, %c0_i32 : i32, i32
  }
  func.func @transform_3(%arg0: i32, %arg1: i32) -> (i32, i32) {
    %c0_i32 = arith.constant 0 : i32
    return %arg0, %arg1 : i32, i32
  }
}

</mosaic_0001>

<llo_original>
// kernel: tpu_custom_call.1
$region0: #{tpu_custom_call.1}
  #allocation0 [shape = 'u32[]', space=smem, size = 0x4, offset = 0x4, fixed_abs, tag = 'smem constant byte address 0x4 - core index']
  #allocation1 [shape = 'u32[144,128]{1,0:T(1,128)}', space=vmem, size = 0x12000, scoped, tag = 'internal scratch']
  #allocation2 [shape = 'f32[1,1]{1,0:T(1,128)S(6)}', space=smem, size = 0x200, scoped, tag = 'scoped memory for tpu_custom_call.1']
  %s0 = inlined_call_operand.<no memory space> [shape: f32[1,1], index: 0, kind: input, shape index: {}]
  %s1 = inlined_call_operand.hbm [shape: f32[16,32], index: 1, kind: input, shape index: {}]
  %s2 = inlined_call_operand.hbm [shape: f32[16,32], index: 2, kind: input, shape index: {}]
  %s3 = inlined_call_operand.hbm [shape: f32[16,16], index: 3, kind: output, shape index: {}]
  %s4 = sld [smem:[#allocation0]]
  $region53: #{tpu_custom_call.1} parent=0
    _
  %s6 = ssub.s32 1, %s4
  %s7 = scalar_select 0, %s6, %s4
  %8 = sst [smem:[#allocation2]] %s0
  $region1: #{tpu_custom_call.1} parent=0
    #allocation3 [shape = 'u8[8192]{0}', space=vmem, size = 0x2000, scoped, tag = 'input window, operand 1']
    #allocation4 [shape = 's32[2]{0}', space=sflag, size = 0x8, scoped, tag = 'scoped memory for tpu_custom_call.1']
    #allocation5 [shape = 's32[2]{0}', space=sflag, size = 0x8, scoped, tag = 'scoped memory for tpu_custom_call.1']
    #allocation6 [shape = 'u8[8192]{0}', space=vmem, size = 0x2000, scoped, tag = 'input window, operand 2, single buffered']
    #allocation7 [shape = 's32[1]{0}', space=sflag, size = 0x4, scoped, tag = 'scoped memory for tpu_custom_call.1']
    #allocation8 [shape = 'u8[8192]{0}', space=vmem, size = 0x2000, scoped, tag = 'output window, operand 0']
    %9 = vsyncpa [#allocation4], 0
    %s10 = scalar_lea.sflag [#allocation4], 1
    %11 = vsyncpa %s10, 0
    %12 = vsyncpa [#allocation7], 0
    %13 = vsyncpa [#allocation5], 0
    %s14 = scalar_lea.sflag [#allocation5], 1
    %15 = vsyncpa %s14, 0
    loop: start=0, step=1, limit=4
    $region2: #{tpu_custom_call.1} parent=1 // loop_pre_header
      _
    $region3: #{tpu_custom_call.1} parent=1 // loop_header
      %s17 = sphi 0, %s21
      %p18 = scmp.ge.s32.totalorder %s17, 4
      %s24 = sphi 0, %s36
      %s25 = sphi 0, %s32
      %s26 = sphi 0, %s24
      %s27 = sphi 0, %s25
      %s28 = sphi 0, %s26
      %s29 = sphi 0, %s27
      %s37 = sphi 0, %s37
      %s39 = sphi 0, %s37
      %s40 = sphi 0, %s39
      %s54 = sphi 0, %s40
      %s60 = sphi 0, %s62
      %s63 = sphi 0, %s60
      %s64 = sphi 0, %s63
      %s80 = sphi 0, %s64
      %s86 = sphi 0, %s88
      %s89 = sphi 0, %s86
      %s90 = sphi 0, %s89
      %s106 = sphi 0, %s90
      %s114 = sphi 0, %s116
      %s117 = sphi 0, %s114
      %s118 = sphi 0, %s117
      %s134 = sphi 0, %s118
    $region4: #{tpu_custom_call.1} parent=1 // loop_header_branch
      %20 = sbr.rel (%p18) target = $region8
    $region5: #{tpu_custom_call.1} parent=1 // loop_body
      %s22 = ssub.s32 %s17, 1
      %s23 = ssub.s32 %s17, 2
      %s30 = sadd.s32 1, %s25
      %p31 = scmp.ge.s32.totalorder %s30, 1
      %s32 = scalar_select %p31, 0, %s30
      %s33 = sadd.s32 1, %s24
      %s34 = scalar_select %p31, %s33, %s24
      %p35 = scmp.ge.s32.totalorder %s34, 2
      %s36 = scalar_select %p35, 0, %s34
      %s38 = sadd.s32 %s37, 1
      %p41 = scmp.eq.s32.totalorder %s17, 1
      %p42 = scmp.ne.s32.totalorder %s37, %s39
      %p43 = scmp.eq.s32.totalorder %s17, 0
      %p44 = por %p42, %p43
      %p45 = scmp.ne.s32.totalorder %s37, %s39
      %p46 = scmp.eq.s32.totalorder %s22, 1
      %p47 = por %p45, %p46
      %p48 = scmp.ne.s32.totalorder %s39, %s40
      %p49 = scmp.eq.s32.totalorder %s22, 0
      %p50 = por %p48, %p49
      %p51 = scmp.ne.s32.totalorder %s39, %s40
      %p52 = scmp.eq.s32.totalorder %s23, 1
      %p53 = por %p51, %p52
      %p55 = scmp.ne.s32.totalorder %s40, %s54
      %p56 = scmp.eq.s32.totalorder %s23, 0
      %p57 = por %p55, %p56
      %s58 = ssub.s32 %s24, %s36
      %p59 = scmp.eq.s32.totalorder %s58, 0
      %s61 = sadd.s32 %s60, 1
      %s62 = scalar_select %p59, %s60, %s61
      %p65 = pneg %p59
      %p66 = scmp.eq.s32.totalorder %s17, 1
      %p67 = por %p65, %p66
      %p68 = scmp.ne.s32.totalorder %s60, %s63
      %p69 = scmp.eq.s32.totalorder %s17, 0
      %p70 = por %p68, %p69
      %p71 = scmp.ne.s32.totalorder %s60, %s63
      %p72 = scmp.eq.s32.totalorder %s22, 1
      %p73 = por %p71, %p72
      %p74 = scmp.ne.s32.totalorder %s63, %s64
      %p75 = scmp.eq.s32.totalorder %s22, 0
      %p76 = por %p74, %p75
      %p77 = scmp.ne.s32.totalorder %s63, %s64
      %p78 = scmp.eq.s32.totalorder %s23, 1
      %p79 = por %p77, %p78
      %p81 = scmp.ne.s32.totalorder %s64, %s80
      %p82 = scmp.eq.s32.totalorder %s23, 0
      %p83 = por %p81, %p82
      %s84 = ssub.s32 %s25, %s32
      %p85 = scmp.eq.s32.totalorder %s84, 0
      %s87 = sadd.s32 %s86, 1
      %s88 = scalar_select %p85, %s86, %s87
      %p91 = pneg %p85
      %p92 = scmp.eq.s32.totalorder %s17, 1
      %p93 = por %p91, %p92
      %p94 = scmp.ne.s32.totalorder %s86, %s89
      %p95 = scmp.eq.s32.totalorder %s17, 0
      %p96 = por %p94, %p95
      %p97 = scmp.ne.s32.totalorder %s86, %s89
      %p98 = scmp.eq.s32.totalorder %s22, 1
      %p99 = por %p97, %p98
      %p100 = scmp.ne.s32.totalorder %s89, %s90
      %p101 = scmp.eq.s32.totalorder %s22, 0
      %p102 = por %p100, %p101
      %p103 = scmp.ne.s32.totalorder %s89, %s90
      %p104 = scmp.eq.s32.totalorder %s23, 1
      %p105 = por %p103, %p104
      %p107 = scmp.ne.s32.totalorder %s90, %s106
      %p108 = scmp.eq.s32.totalorder %s23, 0
      %p109 = por %p107, %p108
      %s110 = ssub.s32 %s24, %s36
      %s111 = ssub.s32 %s25, %s32
      %s112 = sor.u32 %s110, %s111
      %p113 = scmp.eq.s32.totalorder %s112, 0
      %s115 = sadd.s32 %s114, 1
      %s116 = scalar_select %p113, %s114, %s115
      %p119 = pneg %p113
      %p120 = scmp.eq.s32.totalorder %s17, 1
      %p121 = por %p119, %p120
      %p122 = scmp.ne.s32.totalorder %s114, %s117
      %p123 = scmp.eq.s32.totalorder %s17, 0
      %p124 = por %p122, %p123
      %p125 = scmp.ne.s32.totalorder %s114, %s117
      %p126 = scmp.eq.s32.totalorder %s22, 1
      %p127 = por %p125, %p126
      %p128 = scmp.ne.s32.totalorder %s117, %s118
      %p129 = scmp.eq.s32.totalorder %s22, 0
      %p130 = por %p128, %p129
      %p131 = scmp.ne.s32.totalorder %s117, %s118
      %p132 = scmp.eq.s32.totalorder %s23, 1
      %p133 = por %p131, %p132
      %p135 = scmp.ne.s32.totalorder %s118, %s134
      %p136 = scmp.eq.s32.totalorder %s23, 0
      %p137 = por %p135, %p136
      %p138 = scmp.le.s32.totalorder 1, %s17
      %p139 = scmp.lt.s32.totalorder %s17, 3
      %p140 = pnand %p138, %p139
      %p141 = pneg %p140
      // Predicated region
      $region9: #{tpu_custom_call.1} parent=5 // pred_check
        _
      $region10: #{tpu_custom_call.1} parent=5 // pred_check_branch
        %143 = sbr.rel (%p140) target = $region12
      $region11: #{tpu_custom_call.1} parent=5 // pred_region
        %s144 = ssub.s32 %s17, 1
        // Predicated region
        $region13: #{tpu_custom_call.1} parent=11 // pred_check
          %p145 = pneg %p50
        $region14: #{tpu_custom_call.1} parent=11 // pred_check_branch
          %147 = sbr.rel (%p145) target = $region16
        $region15: #{tpu_custom_call.1} parent=11 // pred_region
          _
        $region16: #{tpu_custom_call.1} parent=11 // pred_fallthru
          _
        // Predicated region
        $region17: #{tpu_custom_call.1} parent=11 // pred_check
          %p148 = pneg %p102
        $region18: #{tpu_custom_call.1} parent=11 // pred_check_branch
          %150 = sbr.rel (%p148) target = $region20
        $region19: #{tpu_custom_call.1} parent=11 // pred_region
          %s151 = smul.u32 2, %s27
          %s153 = ssub.s32 256, 256
          %154 = vsyncadd [#allocation7], %s153
          %s155 = smul.addr %s151, 128
          %s156 = scalar_lea.hbm %s2, %s155
          %s157 = sshll.u32 [#allocation6], 4
          %s158 = int_to_ptr.vmem [resolvable:$true] %s157
          %163 = dma.hbm_to_vmem [thread:$0]  %s156, 256, %s158, [#allocation7], 128, 128, 8
        $region20: #{tpu_custom_call.1} parent=11 // pred_fallthru
          _
      $region12: #{tpu_custom_call.1} parent=5 // pred_fallthru
        _
      %p164 = scmp.lt.s32.totalorder %s17, 2
      // Predicated region
      $region21: #{tpu_custom_call.1} parent=5 // pred_check
        %p165 = pneg %p164
      $region22: #{tpu_custom_call.1} parent=5 // pred_check_branch
        %167 = sbr.rel (%p165) target = $region24
      $region23: #{tpu_custom_call.1} parent=5 // pred_region
        // Predicated region
        $region25: #{tpu_custom_call.1} parent=23 // pred_check
          %p168 = pneg %p70
        $region26: #{tpu_custom_call.1} parent=23 // pred_check_branch
          %170 = sbr.rel (%p168) target = $region28
        $region27: #{tpu_custom_call.1} parent=23 // pred_region
          %s171 = sand.u32 %s60, 1
          %s172 = scalar_lea.sflag [#allocation4], %s171
          %s173 = sand.u32 %s60, 1
          %s174 = smul.addr %s173, 8
          %s175 = scalar_lea.vmem [#allocation3], %s174
          %s177 = ssub.s32 128, 128
          %178 = vsyncadd %s172, %s177
          %s179 = smul.addr %s24, 128
          %s180 = scalar_lea.hbm %s1, %s179
          %s182 = sshll.u32 %s175, 4
          %s183 = int_to_ptr.vmem [resolvable:$true] %s182
          %185 = dma.hbm_to_vmem [thread:$0]  %s180, 128, %s183, %s172
        $region28: #{tpu_custom_call.1} parent=23 // pred_fallthru
          _
      $region24: #{tpu_custom_call.1} parent=5 // pred_fallthru
        _
      %p186 = scmp.le.s32.totalorder 1, %s17
      %p187 = scmp.lt.s32.totalorder %s17, 3
      %p188 = pnand %p186, %p187
      %p189 = pneg %p188
      // Predicated region
      $region29: #{tpu_custom_call.1} parent=5 // pred_check
        _
      $region30: #{tpu_custom_call.1} parent=5 // pred_check_branch
        %191 = sbr.rel (%p188) target = $region32
      $region31: #{tpu_custom_call.1} parent=5 // pred_region
        %s192 = ssub.s32 %s17, 1
        %s193 = sand.u32 %s63, 1
        %s194 = scalar_lea.sflag [#allocation4], %s193
        %s195 = sand.u32 %s63, 1
        %s196 = smul.addr %s195, 8
        %s197 = scalar_lea.vmem [#allocation3], %s196
        // Predicated region
        $region33: #{tpu_custom_call.1} parent=31 // pred_check
          %p198 = pneg %p76
        $region34: #{tpu_custom_call.1} parent=31 // pred_check_branch
          %200 = sbr.rel (%p198) target = $region36
        $region35: #{tpu_custom_call.1} parent=31 // pred_region
          %201 = dma.done %s194, 128
        $region36: #{tpu_custom_call.1} parent=31 // pred_fallthru
          _
        // Predicated region
        $region37: #{tpu_custom_call.1} parent=31 // pred_check
          %p202 = pneg %p102
        $region38: #{tpu_custom_call.1} parent=31 // pred_check_branch
          %204 = sbr.rel (%p202) target = $region40
        $region39: #{tpu_custom_call.1} parent=31 // pred_region
          %205 = dma.done [#allocation7], 256
        $region40: #{tpu_custom_call.1} parent=31 // pred_fallthru
          _
        %p206 = pneg %p50
        %p207 = pneg %p47
        %s208 = sand.u32 %s63, 1
        %s209 = scalar_lea.sflag [#allocation4], %s208
        %s210 = sand.u32 %s63, 1
        %s211 = smul.addr %s210, 8
        %s212 = scalar_lea.vmem [#allocation3], %s211
        %p213 = pneg %p76
        %p214 = pneg %p73
        %p215 = pneg %p102
        %p216 = pneg %p99
        %p217 = pneg %p130
        %p218 = pneg %p127
        %s219 = sand.u32 %s117, 1
        %s220 = scalar_lea.sflag [#allocation5], %s219
        %s221 = sand.u32 %s117, 1
        %s222 = smul.addr %s221, 8
        %s223 = scalar_lea.vmem [#allocation8], %s222
        %s224 = smul.u32 2, %s27
        %v225 = vld [vmem:[%s197] sm:$0xff]
        %v226 = vld [vmem:[#allocation6] sm:$0xff]
        %v227 = vld [vmem:[#allocation6 + $0x8] sm:$0xff]
        %vm228 = vcmask 261120
        %v230 = vsel %vm228, %v225, 0
        %v233 = vsel %vm228, %v226, 0
        %v236 = vsel %vm228, %v227, 0
        %238 = vmatprep.subr.mxu0 0.0
        %239 = vmatpush1.xpose.msra.mxu0 0.0
        %240 = vmatprep.subr.mxu0 0.0
        %241 = vmatpush1.xpose.msra.mxu0 0.0
        %242 = vmatprep.subr.mxu0 0.0
        %243 = vmatpush1.xpose.msra.mxu0 0.0
        %244 = vmatprep.subr.mxu0 0.0
        %245 = vmatpush1.xpose.msra.mxu0 0.0
        %246 = vmatprep.subr.mxu0 0.0
        %247 = vmatpush1.xpose.msra.mxu0 0.0
        %248 = vmatprep.subr.mxu0 0.0
        %249 = vmatpush1.xpose.msra.mxu0 0.0
        %250 = vmatprep.subr.mxu0 0.0
        %251 = vmatpush1.xpose.msra.mxu0 0.0
        %252 = vmatprep.subr.mxu0 0.0
        %253 = vmatpush1.xpose.msra.mxu0 0.0
        %254 = vmatprep.subr.mxu0 0.0
        %255 = vmatpush1.xpose.msra.mxu0 0.0
        %256 = vmatprep.subr.mxu0 0.0
        %257 = vmatpush1.xpose.msra.mxu0 0.0
        %258 = vmatprep.subr.mxu0 0.0
        %259 = vmatpush1.xpose.msra.mxu0 0.0
        %260 = vmatprep.subr.mxu0 0.0
        %261 = vmatpush1.xpose.msra.mxu0 0.0
        %262 = vmatprep.subr.mxu0 0.0
        %263 = vmatpush1.xpose.msra.mxu0 0.0
        %264 = vmatprep.subr.mxu0 0.0
        %265 = vmatpush1.xpose.msra.mxu0 0.0
        %266 = vmatprep.subr.mxu0 0.0
        %267 = vmatpush1.xpose.msra.mxu0 %v236
        %268 = vmatprep.subr.mxu0 0.0
        %269 = vmatpush1.xpose.msra.mxu0 %v233
        %270 = vmatprep.subr.mxu0 0.0
        %271 = vmatpush2.xpose.msra.mxu0 0.0
        %272 = vmatprep.subr.mxu0 0.0
        %273 = vmatpush2.xpose.msra.mxu0 0.0
        %274 = vmatprep.subr.mxu0 0.0
        %275 = vmatpush2.xpose.msra.mxu0 0.0
        %276 = vmatprep.subr.mxu0 0.0
        %277 = vmatpush2.xpose.msra.mxu0 0.0
        %278 = vmatprep.subr.mxu0 0.0
        %279 = vmatpush2.xpose.msra.mxu0 0.0
        %280 = vmatprep.subr.mxu0 0.0
        %281 = vmatpush2.xpose.msra.mxu0 0.0
        %282 = vmatprep.subr.mxu0 0.0
        %283 = vmatpush2.xpose.msra.mxu0 0.0
        %284 = vmatprep.subr.mxu0 0.0
        %285 = vmatpush2.xpose.msra.mxu0 0.0
        %286 = vmatprep.subr.mxu0 0.0
        %287 = vmatpush2.xpose.msra.mxu0 0.0
        %288 = vmatprep.subr.mxu0 0.0
        %289 = vmatpush2.xpose.msra.mxu0 0.0
        %290 = vmatprep.subr.mxu0 0.0
        %291 = vmatpush2.xpose.msra.mxu0 0.0
        %292 = vmatprep.subr.mxu0 0.0
        %293 = vmatpush2.xpose.msra.mxu0 0.0
        %294 = vmatprep.subr.mxu0 0.0
        %295 = vmatpush2.xpose.msra.mxu0 0.0
        %296 = vmatprep.subr.mxu0 0.0
        %297 = vmatpush2.xpose.msra.mxu0 0.0
        %298 = vmatprep.subr.mxu0 0.0
        %299 = vmatpush2.xpose.msra.mxu0 0.0
        %300 = vmatprep.subr.mxu0 0.0
        %301 = vmatpush2.xpose.msra.mxu0 0.0
        %302 = vmatprep.mubr.f32.mxu0 0.0
        %303 = vmatmul.mubr.f32.gmra.mxu0 %v230
        %v304 = vpop.f32.mrf.mxu0
        %v305 = vadd.f32 0.0, %v304
        %v306 = vpop.f32.mrf.mxu0
        %307 = vdwg.mxu0
        %s308 = sld [smem:[#allocation2]]
        %v309 = vstv %s308
        %v310 = vmul.f32 %v305, %v309
        %vm311 = vcmask 130048
        %312 = vst.msk [vmem:[%s223] sm:$0xff] %vm311, %v310
        %s313 = sand.u32 %s117, 1
        %s314 = scalar_lea.sflag [#allocation5], %s313
        %s315 = sand.u32 %s117, 1
        %s316 = smul.addr %s315, 8
        %s317 = scalar_lea.vmem [#allocation8], %s316
        // Predicated region
        $region41: #{tpu_custom_call.1} parent=31 // pred_check
          %p318 = pneg %p127
        $region42: #{tpu_custom_call.1} parent=31 // pred_check_branch
          %320 = sbr.rel (%p318) target = $region44
        $region43: #{tpu_custom_call.1} parent=31 // pred_region
          %s322 = ssub.s32 128, 128
          %323 = vsyncadd %s314, %s322
          %s324 = sadd.s32 %s27, %s26
          %s325 = smul.addr %s324, 128
          %s326 = scalar_lea.hbm %s3, %s325
          %s328 = sshll.u32 %s317, 4
          %s329 = int_to_ptr.vmem [resolvable:$true] %s328
          %331 = dma.vmem_to_hbm [thread:$0]  %s329, 128, %s326, %s314
        $region44: #{tpu_custom_call.1} parent=31 // pred_fallthru
          _
      $region32: #{tpu_custom_call.1} parent=5 // pred_fallthru
        _
      %p332 = scmp.le.s32.totalorder 2, %s17
      // Predicated region
      $region45: #{tpu_custom_call.1} parent=5 // pred_check
        %p333 = pneg %p332
      $region46: #{tpu_custom_call.1} parent=5 // pred_check_branch
        %335 = sbr.rel (%p333) target = $region48
      $region47: #{tpu_custom_call.1} parent=5 // pred_region
        %s336 = ssub.s32 %s17, 2
        // Predicated region
        $region49: #{tpu_custom_call.1} parent=47 // pred_check
          %p337 = pneg %p133
        $region50: #{tpu_custom_call.1} parent=47 // pred_check_branch
          %339 = sbr.rel (%p337) target = $region52
        $region51: #{tpu_custom_call.1} parent=47 // pred_region
          %s340 = sand.u32 %s118, 1
          %s341 = scalar_lea.sflag [#allocation5], %s340
          %s342 = sand.u32 %s118, 1
          %s343 = smul.addr %s342, 8
          %s344 = scalar_lea.vmem [#allocation8], %s343
          %345 = dma.done %s341, 128
        $region52: #{tpu_custom_call.1} parent=47 // pred_fallthru
          _
      $region48: #{tpu_custom_call.1} parent=5 // pred_fallthru
        _
    $region6: #{tpu_custom_call.1} parent=1 // loop_footer
      %s21 = sadd.s32 1, %s17
    $region7: #{tpu_custom_call.1} parent=1 // loop_footer_branch
      %16 = sbr.rel target = $region3
    $region8: #{tpu_custom_call.1} parent=1 // loop_exit
      _
    %346 = vsyncpa [#allocation4], 1
    %s347 = scalar_lea.sflag [#allocation4], 1
    %348 = vsyncpa %s347, 1
    %349 = vsyncpa [#allocation7], 1
    %350 = vsyncpa [#allocation5], 1
    %s351 = scalar_lea.sflag [#allocation5], 1
    %352 = vsyncpa %s351, 1

</llo_original>
